<compile_context>
chip_gen: v7x
topology: tpu7x:2x2x1
jax: 0.10.0
libtpu: 0.0.40
codegen_flags: <defaults>
</compile_context>

<pallas_src>
import functools
import math

import jax
import jax.numpy as jnp
import numpy as np
from jax.experimental import pallas as pl
from jax.experimental.pallas import tpu as pltpu

_LOG10 = math.log(10.0)


# ----------------------------------------------------------------------------
# Degree-13 polynomial approximating f(t) = (1+t)^(-ln 10) on t in [0, 1],
# fitted once at import time (deterministic).  Evaluated in v = 2t-1 (well
# conditioned), descending coefficients for Horner on the VPU.
# ----------------------------------------------------------------------------
def _fit_modsig_poly(degree=13, n_nodes=2048):
    v = np.cos(np.linspace(0.0, np.pi, n_nodes))            # Chebyshev-extrema nodes
    t = 0.5 * (v + 1.0)
    f = (1.0 + t) ** (-_LOG10)
    cheb = np.polynomial.chebyshev.chebfit(v, f, degree)
    pow_asc = np.polynomial.chebyshev.cheb2poly(cheb)        # power basis in v, ascending
    return tuple(float(c) for c in pow_asc[::-1])            # descending for Horner


_MODSIG_POLY = _fit_modsig_poly()


def _mod_sigmoid(x):
    """2 * sigmoid(x)**log(10) + 1e-7 with only two EUP transcendentals."""
    t = jnp.exp(-jnp.abs(x))                         # EUP #1, t in (0, 1]
    e = jnp.exp(_LOG10 * jnp.minimum(x, 0.0))        # EUP #2
    v = 2.0 * t - 1.0
    p = _MODSIG_POLY[0]
    for c in _MODSIG_POLY[1:]:                       # Horner: p ~= (1 + t)^(-ln 10)
        p = p * v + c
    return 2.0 * e * p + 1e-7


# ----------------------------------------------------------------------------
# Kernel: one (batch, grain-tile) step. BatchNorm is pre-folded into w1/b1.
# ----------------------------------------------------------------------------
def _decoder_kernel(z_ref, w1_ref, b1_ref, w2_ref, b2_ref, o_ref):
    z = z_ref[0]                                                        # (tg, z_dim)

    # Linear 1 (BN folded) + LeakyReLU(0.2)
    h = jnp.dot(z, w1_ref[...], preferred_element_type=jnp.float32)
    h = h + b1_ref[...]                                                 # (tg, h_dim)
    h = jnp.maximum(h, 0.2 * h)

    # Linear 2
    w2 = w2_ref[...]
    x = jnp.dot(h.astype(w2.dtype), w2, preferred_element_type=jnp.float32)
    x = x + b2_ref[...]                                                 # (tg, F) lane-dense

    y = _mod_sigmoid(x)                                                 # (tg, F)

    # Fused permute: store (F, tg) so HBM layout is directly (B, F, n_grains).
    o_ref[0] = jnp.transpose(y).astype(o_ref.dtype)


# ----------------------------------------------------------------------------
# Tile / VMEM planning.
# ----------------------------------------------------------------------------
def _plan_tiles(B, n_grains, z_dim, h_dim, filter_size, vmem_budget_bytes):
    budget = min(int(vmem_budget_bytes), 48 << 20)           # safe on v7x's 64 MiB
    # Resident (double-buffered) weights + per-grain-row bytes (double-buffered
    # z/out blocks, h, and a few f32 epilogue temporaries).
    weight_bytes = 2 * 4 * (z_dim * h_dim + h_dim + h_dim * filter_size + filter_size)
    per_row = 4 * (2 * z_dim + h_dim + 6 * filter_size)
    cap = max(8, (budget - weight_bytes) // per_row)

    if n_grains <= cap:
        tg = n_grains
        if B == 1 and n_grains >= 256:
            # Keep >= 2 parallel grid steps so both v7x TensorCores get work.
            tg = max(128, (((n_grains + 1) // 2) // 128) * 128)
    else:
        # Partial grain tiles must be a multiple of 128 (output lane dim).
        tg = max(128, (min(cap, n_grains) // 128) * 128)
        if tg >= n_grains:
            tg = n_grains
    grid_g = (n_grains + tg - 1) // tg

    vmem_need = weight_bytes + tg * per_row
    vmem_limit = int(max(16 << 20, min(vmem_need + (8 << 20), 60 << 20)))
    return tg, grid_g, vmem_limit


# ----------------------------------------------------------------------------
# Wrapper.
# ----------------------------------------------------------------------------
def spectral_decoder_forward(z, params, *, n_grains,
                             compute_dtype=jnp.float32,
                             vmem_budget_bytes=32 << 20):
    """z: (B*n_grains, z_dim) float32 -> (B, filter_size, n_grains) float32."""
    N, z_dim = z.shape
    assert N % n_grains == 0, (N, n_grains)
    B = N // n_grains
    h_dim = params["w1"].shape[1]
    filter_size = params["w2"].shape[1]

    # Fold BatchNorm1d (eval mode, running stats) + b1 into W1'/b1'.
    eps = 1e-5
    scale = params["gamma"] * jax.lax.rsqrt(params["var"] + eps)          # (1, h_dim)
    w1f = (params["w1"] * scale).astype(compute_dtype)                    # (z_dim, h_dim)
    b1f = ((params["b1"] - params["mean"]) * scale
           + params["beta"]).astype(jnp.float32)                          # (1, h_dim)
    w2 = params["w2"].astype(compute_dtype)                               # (h_dim, F)
    b2 = params["b2"].astype(jnp.float32)                                 # (1, F)

    z3 = z.reshape(B, n_grains, z_dim).astype(compute_dtype)              # free view for f32

    tg, grid_g, vmem_limit = _plan_tiles(B, n_grains, z_dim, h_dim,
                                         filter_size, vmem_budget_bytes)

    return pl.pallas_call(
        _decoder_kernel,
        out_shape=jax.ShapeDtypeStruct((B, filter_size, n_grains), jnp.float32),
        grid_spec=pltpu.PrefetchScalarGridSpec(
            num_scalar_prefetch=0,
            grid=(B, grid_g),
            in_specs=[
                pl.BlockSpec((1, tg, z_dim), lambda b, g: (b, g, 0)),        # z tile
                pl.BlockSpec((z_dim, h_dim), lambda b, g: (0, 0)),           # W1 (BN-folded)
                pl.BlockSpec((1, h_dim), lambda b, g: (0, 0)),               # b1 (BN-folded)
                pl.BlockSpec((h_dim, filter_size), lambda b, g: (0, 0)),     # W2
                pl.BlockSpec((1, filter_size), lambda b, g: (0, 0)),         # b2
            ],
            # Transposed store: block (1, F, tg) at (b, 0, g) -> (B, F, n_grains).
            out_specs=pl.BlockSpec((1, filter_size, tg), lambda b, g: (b, 0, g)),
        ),
        compiler_params=pltpu.CompilerParams(
            dimension_semantics=("parallel", "parallel"),
            vmem_limit_bytes=vmem_limit,
        ),
    )(z3, w1f, b1f, w2, b2)


# ----------------------------------------------------------------------------
# Pure-JAX reference (unfused BN, direct sigmoid**log10) and parameter init.
# ----------------------------------------------------------------------------
def _reference(z, params):
    hi = jax.lax.Precision.HIGHEST
    h = jnp.dot(z, params["w1"], precision=hi) + params["b1"]
    h = (h - params["mean"]) / jnp.sqrt(params["var"] + 1e-5) * params["gamma"] + params["beta"]
    h = jnp.where(h > 0, h, 0.2 * h)
    out = jnp.dot(h, params["w2"], precision=hi) + params["b2"]
    s = jax.nn.sigmoid(out)
    return 2.0 * s ** math.log(10.0) + 1e-7


def init_params(key, z_dim, h_dim, filter_size):
    ks = jax.random.split(key, 6)
    lim1 = 1.0 / math.sqrt(z_dim)
    lim2 = 1.0 / math.sqrt(h_dim)
    return {
        "w1": jax.random.uniform(ks[0], (z_dim, h_dim), jnp.float32, -lim1, lim1),
        "b1": jax.random.uniform(ks[1], (1, h_dim), jnp.float32, -lim1, lim1),
        "gamma": jnp.ones((1, h_dim), jnp.float32),
        "beta": jnp.zeros((1, h_dim), jnp.float32),
        "mean": 0.1 * jax.random.normal(ks[2], (1, h_dim), jnp.float32),
        "var": 1.0 + 0.1 * jax.random.uniform(ks[3], (1, h_dim), jnp.float32),
        "w2": jax.random.uniform(ks[4], (h_dim, filter_size), jnp.float32, -lim2, lim2),
        "b2": jax.random.uniform(ks[5], (1, filter_size), jnp.float32, -lim2, lim2),
    }


if __name__ == "__main__":
    # Small shapes: batch=2, n_grains=8 (N=16 flattened rows), z_dim=32,
    # h_dim=128, filter_size (n_band) = 256.
    B, n_grains = 2, 8
    z_dim, h_dim, filter_size = 32, 128, 256

    key = jax.random.PRNGKey(0)
    kz, kp = jax.random.split(key)
    z = jax.random.normal(kz, (B * n_grains, z_dim), jnp.float32)
    params = init_params(kp, z_dim, h_dim, filter_size)

    fwd = jax.jit(functools.partial(spectral_decoder_forward, n_grains=n_grains))
    out = jax.block_until_ready(fwd(z, params))

    ref_flat = _reference(z, params)
    ref = jnp.transpose(ref_flat.reshape(B, n_grains, filter_size), (0, 2, 1))

    assert out.shape == (B, filter_size, n_grains), out.shape
    max_err = float(jnp.max(jnp.abs(out - ref)))
    assert jnp.allclose(out, ref, atol=2e-5, rtol=2e-5), max_err

    print("KERNEL_OK")
</pallas_src>

<mosaic_0001>
module attributes {stable_mosaic.version = 11 : i64} {
  func.func @_decoder_kernel(%arg0: i32, %arg1: i32, %arg2: memref<1x8x32xf32, #tpu.memory_space<vmem>>, %arg3: memref<32x128xf32, #tpu.memory_space<vmem>>, %arg4: memref<1x128xf32, #tpu.memory_space<vmem>>, %arg5: memref<128x256xf32, #tpu.memory_space<vmem>>, %arg6: memref<1x256xf32, #tpu.memory_space<vmem>>, %arg7: memref<1x256x8xf32, #tpu.memory_space<vmem>>) attributes {dimension_semantics = [#tpu.dimension_semantics<parallel>, #tpu.dimension_semantics<parallel>], iteration_bounds = array<i64: 2, 1>, scalar_prefetch = 0 : i64, scratch_operands = 0 : i64, tpu.core_type = #tpu.core_type<tc>, window_params = [{transform_indices = @transform_0, window_bounds = array<i64: 1, 8, 32>}, {pipeline_mode = #tpu.pipeline_mode<synchronous>, transform_indices = @transform_1, window_bounds = array<i64: 32, 128>}, {pipeline_mode = #tpu.pipeline_mode<synchronous>, transform_indices = @transform_2, window_bounds = array<i64: 1, 128>}, {pipeline_mode = #tpu.pipeline_mode<synchronous>, transform_indices = @transform_3, window_bounds = array<i64: 128, 256>}, {pipeline_mode = #tpu.pipeline_mode<synchronous>, transform_indices = @transform_4, window_bounds = array<i64: 1, 256>}, {transform_indices = @transform_5, window_bounds = array<i64: 1, 256, 8>}]} {
    %c0 = arith.constant 0 : index
    %c0_0 = arith.constant 0 : index
    %c0_1 = arith.constant 0 : index
    %0 = vector.load %arg2[%c0, %c0_0, %c0_1] : memref<1x8x32xf32, #tpu.memory_space<vmem>>, vector<1x8x32xf32>
    %1 = vector.shape_cast %0 : vector<1x8x32xf32> to vector<8x32xf32>
    %c0_2 = arith.constant 0 : index
    %c0_3 = arith.constant 0 : index
    %2 = vector.load %arg3[%c0_2, %c0_3] : memref<32x128xf32, #tpu.memory_space<vmem>>, vector<32x128xf32>
    %cst = arith.constant dense<0.000000e+00> : vector<8x128xf32>
    %3 = tpu.matmul %1, %2, %cst {dimension_numbers = #tpu.dot_dimension_numbers<[1], [0], [0], [1], [0, 0, 1, 1], [], []>} : vector<8x32xf32>, vector<32x128xf32>, vector<8x128xf32> -> vector<8x128xf32>
    %c0_4 = arith.constant 0 : index
    %c0_5 = arith.constant 0 : index
    %4 = vector.load %arg4[%c0_4, %c0_5] : memref<1x128xf32, #tpu.memory_space<vmem>>, vector<1x128xf32>
    %5 = vector.broadcast %4 : vector<1x128xf32> to vector<8x128xf32>
    %6 = arith.addf %3, %5 : vector<8x128xf32>
    %cst_6 = arith.constant 2.000000e-01 : f32
    %7 = vector.broadcast %cst_6 : f32 to vector<8x128xf32>
    %8 = arith.mulf %7, %6 : vector<8x128xf32>
    %9 = arith.maximumf %6, %8 : vector<8x128xf32>
    %c0_7 = arith.constant 0 : index
    %c0_8 = arith.constant 0 : index
    %10 = vector.load %arg5[%c0_7, %c0_8] : memref<128x256xf32, #tpu.memory_space<vmem>>, vector<128x256xf32>
    %cst_9 = arith.constant dense<0.000000e+00> : vector<8x256xf32>
    %11 = tpu.matmul %9, %10, %cst_9 {dimension_numbers = #tpu.dot_dimension_numbers<[1], [0], [0], [1], [0, 0, 1, 1], [], []>} : vector<8x128xf32>, vector<128x256xf32>, vector<8x256xf32> -> vector<8x256xf32>
    %c0_10 = arith.constant 0 : index
    %c0_11 = arith.constant 0 : index
    %12 = vector.load %arg6[%c0_10, %c0_11] : memref<1x256xf32, #tpu.memory_space<vmem>>, vector<1x256xf32>
    %13 = vector.broadcast %12 : vector<1x256xf32> to vector<8x256xf32>
    %14 = arith.addf %11, %13 : vector<8x256xf32>
    %15 = math.absf %14 : vector<8x256xf32>
    %cst_12 = arith.constant 0.000000e+00 : f32
    %16 = vector.broadcast %cst_12 : f32 to vector<8x256xf32>
    %17 = arith.subf %16, %15 : vector<8x256xf32>
    %18 = math.exp %17 : vector<8x256xf32>
    %cst_13 = arith.constant 0.000000e+00 : f32
    %19 = vector.broadcast %cst_13 : f32 to vector<8x256xf32>
    %20 = arith.minimumf %14, %19 : vector<8x256xf32>
    %cst_14 = arith.constant 2.30258512 : f32
    %21 = vector.broadcast %cst_14 : f32 to vector<8x256xf32>
    %22 = arith.mulf %21, %20 : vector<8x256xf32>
    %23 = math.exp %22 : vector<8x256xf32>
    %cst_15 = arith.constant 2.000000e+00 : f32
    %24 = vector.broadcast %cst_15 : f32 to vector<8x256xf32>
    %25 = arith.mulf %24, %18 : vector<8x256xf32>
    %cst_16 = arith.constant 1.000000e+00 : f32
    %26 = vector.broadcast %cst_16 : f32 to vector<8x256xf32>
    %27 = arith.subf %25, %26 : vector<8x256xf32>
    %cst_17 = arith.constant -1.11884337E-5 : f32
    %28 = vector.broadcast %cst_17 : f32 to vector<8x256xf32>
    %29 = arith.mulf %28, %27 : vector<8x256xf32>
    %cst_18 = arith.constant 2.96507496E-5 : f32
    %30 = vector.broadcast %cst_18 : f32 to vector<8x256xf32>
    %31 = arith.addf %29, %30 : vector<8x256xf32>
    %32 = arith.mulf %31, %27 : vector<8x256xf32>
    %cst_19 = arith.constant -4.16276598E-5 : f32
    %33 = vector.broadcast %cst_19 : f32 to vector<8x256xf32>
    %34 = arith.addf %32, %33 : vector<8x256xf32>
    %35 = arith.mulf %34, %27 : vector<8x256xf32>
    %cst_20 = arith.constant 1.14402654E-4 : f32
    %36 = vector.broadcast %cst_20 : f32 to vector<8x256xf32>
    %37 = arith.addf %35, %36 : vector<8x256xf32>
    %38 = arith.mulf %37, %27 : vector<8x256xf32>
    %cst_21 = arith.constant -3.55732976E-4 : f32
    %39 = vector.broadcast %cst_21 : f32 to vector<8x256xf32>
    %40 = arith.addf %38, %39 : vector<8x256xf32>
    %41 = arith.mulf %40, %27 : vector<8x256xf32>
    %cst_22 = arith.constant 9.2892081E-4 : f32
    %42 = vector.broadcast %cst_22 : f32 to vector<8x256xf32>
    %43 = arith.addf %41, %42 : vector<8x256xf32>
    %44 = arith.mulf %43, %27 : vector<8x256xf32>
    %cst_23 = arith.constant -0.00236203265 : f32
    %45 = vector.broadcast %cst_23 : f32 to vector<8x256xf32>
    %46 = arith.addf %44, %45 : vector<8x256xf32>
    %47 = arith.mulf %46, %27 : vector<8x256xf32>
    %cst_24 = arith.constant 0.00597630627 : f32
    %48 = vector.broadcast %cst_24 : f32 to vector<8x256xf32>
    %49 = arith.addf %47, %48 : vector<8x256xf32>
    %50 = arith.mulf %49, %27 : vector<8x256xf32>
    %cst_25 = arith.constant -0.0147424238 : f32
    %51 = vector.broadcast %cst_25 : f32 to vector<8x256xf32>
    %52 = arith.addf %50, %51 : vector<8x256xf32>
    %53 = arith.mulf %52, %27 : vector<8x256xf32>
    %cst_26 = arith.constant 0.0350860804 : f32
    %54 = vector.broadcast %cst_26 : f32 to vector<8x256xf32>
    %55 = arith.addf %53, %54 : vector<8x256xf32>
    %56 = arith.mulf %55, %27 : vector<8x256xf32>
    %cst_27 = arith.constant -0.0793996825 : f32
    %57 = vector.broadcast %cst_27 : f32 to vector<8x256xf32>
    %58 = arith.addf %56, %57 : vector<8x256xf32>
    %59 = arith.mulf %58, %27 : vector<8x256xf32>
    %cst_28 = arith.constant 0.166085601 : f32
    %60 = vector.broadcast %cst_28 : f32 to vector<8x256xf32>
    %61 = arith.addf %59, %60 : vector<8x256xf32>
    %62 = arith.mulf %61, %27 : vector<8x256xf32>
    %cst_29 = arith.constant -0.301737517 : f32
    %63 = vector.broadcast %cst_29 : f32 to vector<8x256xf32>
    %64 = arith.addf %62, %63 : vector<8x256xf32>
    %65 = arith.mulf %64, %27 : vector<8x256xf32>
    %cst_30 = arith.constant 0.393128842 : f32
    %66 = vector.broadcast %cst_30 : f32 to vector<8x256xf32>
    %67 = arith.addf %65, %66 : vector<8x256xf32>
    %cst_31 = arith.constant 2.000000e+00 : f32
    %68 = vector.broadcast %cst_31 : f32 to vector<8x256xf32>
    %69 = arith.mulf %68, %23 : vector<8x256xf32>
    %70 = arith.mulf %69, %67 : vector<8x256xf32>
    %cst_32 = arith.constant 1.000000e-07 : f32
    %71 = vector.broadcast %cst_32 : f32 to vector<8x256xf32>
    %72 = arith.addf %70, %71 : vector<8x256xf32>
    %73 = tpu.transpose %72, [1, 0] : vector<8x256xf32> -> vector<256x8xf32>
    %c0_33 = arith.constant 0 : index
    %c0_34 = arith.constant 0 : index
    %c0_35 = arith.constant 0 : index
    %74 = vector.load %arg7[%c0_33, %c0_34, %c0_35] : memref<1x256x8xf32, #tpu.memory_space<vmem>>, vector<1x256x8xf32>
    %75 = vector.shape_cast %74 : vector<1x256x8xf32> to vector<256x8xf32>
    %76 = vector.shape_cast %73 : vector<256x8xf32> to vector<1x256x8xf32>
    tpu.vector_store %arg7[%c0_33, %c0_34, %c0_35], %76 {strides = array<i32>} : memref<1x256x8xf32, #tpu.memory_space<vmem>>, vector<1x256x8xf32>,
    return
  }
  func.func @transform_0(%arg0: i32, %arg1: i32) -> (i32, i32, i32) {
    %c0_i32 = arith.constant 0 : i32
    %c0_i32_0 = arith.constant 0 : i32
    return %arg0, %arg1, %c0_i32 : i32, i32, i32
  }
  func.func @transform_1(%arg0: i32, %arg1: i32) -> (i32, i32) {
    %c0_i32 = arith.constant 0 : i32
    %c0_i32_0 = arith.constant 0 : i32
    %c0_i32_1 = arith.constant 0 : i32
    return %c0_i32, %c0_i32_0 : i32, i32
  }
  func.func @transform_2(%arg0: i32, %arg1: i32) -> (i32, i32) {
    %c0_i32 = arith.constant 0 : i32
    %c0_i32_0 = arith.constant 0 : i32
    %c0_i32_1 = arith.constant 0 : i32
    return %c0_i32, %c0_i32_0 : i32, i32
  }
  func.func @transform_3(%arg0: i32, %arg1: i32) -> (i32, i32) {
    %c0_i32 = arith.constant 0 : i32
    %c0_i32_0 = arith.constant 0 : i32
    %c0_i32_1 = arith.constant 0 : i32
    return %c0_i32, %c0_i32_0 : i32, i32
  }
  func.func @transform_4(%arg0: i32, %arg1: i32) -> (i32, i32) {
    %c0_i32 = arith.constant 0 : i32
    %c0_i32_0 = arith.constant 0 : i32
    %c0_i32_1 = arith.constant 0 : i32
    return %c0_i32, %c0_i32_0 : i32, i32
  }
  func.func @transform_5(%arg0: i32, %arg1: i32) -> (i32, i32, i32) {
    %c0_i32 = arith.constant 0 : i32
    %c0_i32_0 = arith.constant 0 : i32
    return %arg0, %c0_i32, %arg1 : i32, i32, i32
  }
}

</mosaic_0001>

<llo_original>
// kernel: spectral_decoder_forward.1
$region0: #{spectral_decoder_forward.1}
  #allocation0 [shape = 'u32[]', space=smem, size = 0x4, offset = 0x4, fixed_abs, tag = 'smem constant byte address 0x4 - core index']
  #allocation1 [shape = 'u32[144,128]{1,0:T(1,128)}', space=vmem, size = 0x12000, scoped, tag = 'internal scratch']
  %s0 = inlined_call_operand.vmem [shape: f32[2,8,32], index: 0, kind: input, shape index: {}]
  %s1 = inlined_call_operand.vmem [shape: f32[32,128], index: 1, kind: input, shape index: {}]
  %s2 = inlined_call_operand.vmem [shape: f32[1,128], index: 2, kind: input, shape index: {}]
  %s3 = inlined_call_operand.hbm [shape: f32[128,256], index: 3, kind: input, shape index: {}]
  %s4 = inlined_call_operand.vmem [shape: f32[1,256], index: 4, kind: input, shape index: {}]
  %s5 = inlined_call_operand.vmem [shape: f32[2,256,8], index: 5, kind: output, shape index: {}]
  %s6 = sld [smem:[#allocation0]]
  $region57: #{spectral_decoder_forward.1} parent=0
    _
  %s8 = ssub.s32 1, %s6
  %s9 = scalar_select 0, %s8, %s6
  $region1: #{spectral_decoder_forward.1} parent=0
    #allocation2 [shape = 'u8[131072]{0}', space=vmem, size = 0x20000, scoped, tag = 'input window, operand 3, single buffered']
    #allocation3 [shape = 's32[2]{0}', space=sflag, size = 0x8, scoped, tag = 'scoped memory for spectral_decoder_forward.1']
    %10 = vsyncpa [#allocation3], 0
    loop: start=0, step=1, limit=4
    $region2: #{spectral_decoder_forward.1} parent=1 // loop_pre_header
      _
    $region3: #{spectral_decoder_forward.1} parent=1 // loop_header
      %s12 = sphi 0, %s16
      %p13 = scmp.ge.s32.totalorder %s12, 4
      %s19 = sphi 0, %s31
      %s20 = sphi 0, %s27
      %s21 = sphi 0, %s19
      %s22 = sphi 0, %s20
      %s23 = sphi 0, %s21
      %s24 = sphi 0, %s22
      %s36 = sphi 0, %s38
      %s39 = sphi 0, %s36
      %s40 = sphi 0, %s39
      %s56 = sphi 0, %s40
      %s60 = sphi 0, %s60
      %s62 = sphi 0, %s60
      %s63 = sphi 0, %s62
      %s77 = sphi 0, %s63
      %s81 = sphi 0, %s81
      %s83 = sphi 0, %s81
      %s84 = sphi 0, %s83
      %s98 = sphi 0, %s84
      %s102 = sphi 0, %s102
      %s104 = sphi 0, %s102
      %s105 = sphi 0, %s104
      %s119 = sphi 0, %s105
      %s123 = sphi 0, %s123
      %s125 = sphi 0, %s123
      %s126 = sphi 0, %s125
      %s140 = sphi 0, %s126
      %s148 = sphi 0, %s150
      %s151 = sphi 0, %s148
      %s152 = sphi 0, %s151
      %s168 = sphi 0, %s152
    $region4: #{spectral_decoder_forward.1} parent=1 // loop_header_branch
      %15 = sbr.rel (%p13) target = $region8
    $region5: #{spectral_decoder_forward.1} parent=1 // loop_body
      %s17 = ssub.s32 %s12, 1
      %s18 = ssub.s32 %s12, 2
      %s25 = sadd.s32 1, %s20
      %p26 = scmp.ge.s32.totalorder %s25, 1
      %s27 = scalar_select %p26, 0, %s25
      %s28 = sadd.s32 1, %s19
      %s29 = scalar_select %p26, %s28, %s19
      %p30 = scmp.ge.s32.totalorder %s29, 2
      %s31 = scalar_select %p30, 0, %s29
      %s32 = ssub.s32 %s19, %s31
      %s33 = ssub.s32 %s20, %s27
      %s34 = sor.u32 %s32, %s33
      %p35 = scmp.eq.s32.totalorder %s34, 0
      %s37 = sadd.s32 %s36, 1
      %s38 = scalar_select %p35, %s36, %s37
      %p41 = pneg %p35
      %p42 = scmp.eq.s32.totalorder %s12, 1
      %p43 = por %p41, %p42
      %p44 = scmp.ne.s32.totalorder %s36, %s39
      %p45 = scmp.eq.s32.totalorder %s12, 0
      %p46 = por %p44, %p45
      %p47 = scmp.ne.s32.totalorder %s36, %s39
      %p48 = scmp.eq.s32.totalorder %s17, 1
      %p49 = por %p47, %p48
      %p50 = scmp.ne.s32.totalorder %s39, %s40
      %p51 = scmp.eq.s32.totalorder %s17, 0
      %p52 = por %p50, %p51
      %p53 = scmp.ne.s32.totalorder %s39, %s40
      %p54 = scmp.eq.s32.totalorder %s18, 1
      %p55 = por %p53, %p54
      %p57 = scmp.ne.s32.totalorder %s40, %s56
      %p58 = scmp.eq.s32.totalorder %s18, 0
      %p59 = por %p57, %p58
      %s61 = sadd.s32 %s60, 1
      %p64 = scmp.eq.s32.totalorder %s12, 1
      %p65 = scmp.ne.s32.totalorder %s60, %s62
      %p66 = scmp.eq.s32.totalorder %s12, 0
      %p67 = por %p65, %p66
      %p68 = scmp.ne.s32.totalorder %s60, %s62
      %p69 = scmp.eq.s32.totalorder %s17, 1
      %p70 = por %p68, %p69
      %p71 = scmp.ne.s32.totalorder %s62, %s63
      %p72 = scmp.eq.s32.totalorder %s17, 0
      %p73 = por %p71, %p72
      %p74 = scmp.ne.s32.totalorder %s62, %s63
      %p75 = scmp.eq.s32.totalorder %s18, 1
      %p76 = por %p74, %p75
      %p78 = scmp.ne.s32.totalorder %s63, %s77
      %p79 = scmp.eq.s32.totalorder %s18, 0
      %p80 = por %p78, %p79
      %s82 = sadd.s32 %s81, 1
      %p85 = scmp.eq.s32.totalorder %s12, 1
      %p86 = scmp.ne.s32.totalorder %s81, %s83
      %p87 = scmp.eq.s32.totalorder %s12, 0
      %p88 = por %p86, %p87
      %p89 = scmp.ne.s32.totalorder %s81, %s83
      %p90 = scmp.eq.s32.totalorder %s17, 1
      %p91 = por %p89, %p90
      %p92 = scmp.ne.s32.totalorder %s83, %s84
      %p93 = scmp.eq.s32.totalorder %s17, 0
      %p94 = por %p92, %p93
      %p95 = scmp.ne.s32.totalorder %s83, %s84
      %p96 = scmp.eq.s32.totalorder %s18, 1
      %p97 = por %p95, %p96
      %p99 = scmp.ne.s32.totalorder %s84, %s98
      %p100 = scmp.eq.s32.totalorder %s18, 0
      %p101 = por %p99, %p100
      %s103 = sadd.s32 %s102, 1
      %p106 = scmp.eq.s32.totalorder %s12, 1
      %p107 = scmp.ne.s32.totalorder %s102, %s104
      %p108 = scmp.eq.s32.totalorder %s12, 0
      %p109 = por %p107, %p108
      %p110 = scmp.ne.s32.totalorder %s102, %s104
      %p111 = scmp.eq.s32.totalorder %s17, 1
      %p112 = por %p110, %p111
      %p113 = scmp.ne.s32.totalorder %s104, %s105
      %p114 = scmp.eq.s32.totalorder %s17, 0
      %p115 = por %p113, %p114
      %p116 = scmp.ne.s32.totalorder %s104, %s105
      %p117 = scmp.eq.s32.totalorder %s18, 1
      %p118 = por %p116, %p117
      %p120 = scmp.ne.s32.totalorder %s105, %s119
      %p121 = scmp.eq.s32.totalorder %s18, 0
      %p122 = por %p120, %p121
      %s124 = sadd.s32 %s123, 1
      %p127 = scmp.eq.s32.totalorder %s12, 1
      %p128 = scmp.ne.s32.totalorder %s123, %s125
      %p129 = scmp.eq.s32.totalorder %s12, 0
      %p130 = por %p128, %p129
      %p131 = scmp.ne.s32.totalorder %s123, %s125
      %p132 = scmp.eq.s32.totalorder %s17, 1
      %p133 = por %p131, %p132
      %p134 = scmp.ne.s32.totalorder %s125, %s126
      %p135 = scmp.eq.s32.totalorder %s17, 0
      %p136 = por %p134, %p135
      %p137 = scmp.ne.s32.totalorder %s125, %s126
      %p138 = scmp.eq.s32.totalorder %s18, 1
      %p139 = por %p137, %p138
      %p141 = scmp.ne.s32.totalorder %s126, %s140
      %p142 = scmp.eq.s32.totalorder %s18, 0
      %p143 = por %p141, %p142
      %s144 = ssub.s32 %s19, %s31
      %s145 = ssub.s32 %s20, %s27
      %s146 = sor.u32 %s144, %s145
      %p147 = scmp.eq.s32.totalorder %s146, 0
      %s149 = sadd.s32 %s148, 1
      %s150 = scalar_select %p147, %s148, %s149
      %p153 = pneg %p147
      %p154 = scmp.eq.s32.totalorder %s12, 1
      %p155 = por %p153, %p154
      %p156 = scmp.ne.s32.totalorder %s148, %s151
      %p157 = scmp.eq.s32.totalorder %s12, 0
      %p158 = por %p156, %p157
      %p159 = scmp.ne.s32.totalorder %s148, %s151
      %p160 = scmp.eq.s32.totalorder %s17, 1
      %p161 = por %p159, %p160
      %p162 = scmp.ne.s32.totalorder %s151, %s152
      %p163 = scmp.eq.s32.totalorder %s17, 0
      %p164 = por %p162, %p163
      %p165 = scmp.ne.s32.totalorder %s151, %s152
      %p166 = scmp.eq.s32.totalorder %s18, 1
      %p167 = por %p165, %p166
      %p169 = scmp.ne.s32.totalorder %s152, %s168
      %p170 = scmp.eq.s32.totalorder %s18, 0
      %p171 = por %p169, %p170
      %p172 = scmp.le.s32.totalorder 1, %s12
      %p173 = scmp.lt.s32.totalorder %s12, 3
      %p174 = pnand %p172, %p173
      %p175 = pneg %p174
      // Predicated region
      $region9: #{spectral_decoder_forward.1} parent=5 // pred_check
        _
      $region10: #{spectral_decoder_forward.1} parent=5 // pred_check_branch
        %177 = sbr.rel (%p174) target = $region12
      $region11: #{spectral_decoder_forward.1} parent=5 // pred_region
        %s178 = ssub.s32 %s12, 1
        // Predicated region
        $region13: #{spectral_decoder_forward.1} parent=11 // pred_check
          %p179 = pneg %p73
        $region14: #{spectral_decoder_forward.1} parent=11 // pred_check_branch
          %181 = sbr.rel (%p179) target = $region16
        $region15: #{spectral_decoder_forward.1} parent=11 // pred_region
          _
        $region16: #{spectral_decoder_forward.1} parent=11 // pred_fallthru
          _
        // Predicated region
        $region17: #{spectral_decoder_forward.1} parent=11 // pred_check
          %p182 = pneg %p94
        $region18: #{spectral_decoder_forward.1} parent=11 // pred_check_branch
          %184 = sbr.rel (%p182) target = $region20
        $region19: #{spectral_decoder_forward.1} parent=11 // pred_region
          _
        $region20: #{spectral_decoder_forward.1} parent=11 // pred_fallthru
          _
        // Predicated region
        $region21: #{spectral_decoder_forward.1} parent=11 // pred_check
          %p185 = pneg %p115
        $region22: #{spectral_decoder_forward.1} parent=11 // pred_check_branch
          %187 = sbr.rel (%p185) target = $region24
        $region23: #{spectral_decoder_forward.1} parent=11 // pred_region
          %s189 = ssub.s32 4096, 4096
          %190 = vsyncadd [#allocation3], %s189
          %s191 = sshll.u32 [#allocation2], 4
          %s192 = int_to_ptr.vmem [resolvable:$true] %s191
          %197 = dma.hbm_to_vmem [thread:$0]  %s3, 4096, %s192, [#allocation3], 256, 256, 16
        $region24: #{spectral_decoder_forward.1} parent=11 // pred_fallthru
          _
        // Predicated region
        $region25: #{spectral_decoder_forward.1} parent=11 // pred_check
          %p198 = pneg %p136
        $region26: #{spectral_decoder_forward.1} parent=11 // pred_check_branch
          %200 = sbr.rel (%p198) target = $region28
        $region27: #{spectral_decoder_forward.1} parent=11 // pred_region
          _
        $region28: #{spectral_decoder_forward.1} parent=11 // pred_fallthru
          _
      $region12: #{spectral_decoder_forward.1} parent=5 // pred_fallthru
        _
      %p201 = scmp.lt.s32.totalorder %s12, 2
      // Predicated region
      $region29: #{spectral_decoder_forward.1} parent=5 // pred_check
        %p202 = pneg %p201
      $region30: #{spectral_decoder_forward.1} parent=5 // pred_check_branch
        %204 = sbr.rel (%p202) target = $region32
      $region31: #{spectral_decoder_forward.1} parent=5 // pred_region
        // Predicated region
        $region33: #{spectral_decoder_forward.1} parent=31 // pred_check
          %p205 = pneg %p46
        $region34: #{spectral_decoder_forward.1} parent=31 // pred_check_branch
          %207 = sbr.rel (%p205) target = $region36
        $region35: #{spectral_decoder_forward.1} parent=31 // pred_region
          %p208 = scmp.lt.s32.totalorder %s19, 1
          %s209 = scalar_select %p208, %s19, 1
          %p210 = scmp.lt.s32.totalorder %s20, 0
          %s211 = scalar_select %p210, %s20, 0
          %s212 = sadd.s32 %s211, %s209
          %s213 = smul.addr %s212, 8
          %s214 = scalar_lea.vmem %s0, %s213
        $region36: #{spectral_decoder_forward.1} parent=31 // pred_fallthru
          _
      $region32: #{spectral_decoder_forward.1} parent=5 // pred_fallthru
        _
      %p215 = scmp.le.s32.totalorder 1, %s12
      %p216 = scmp.lt.s32.totalorder %s12, 3
      %p217 = pnand %p215, %p216
      %p218 = pneg %p217
      // Predicated region
      $region37: #{spectral_decoder_forward.1} parent=5 // pred_check
        _
      $region38: #{spectral_decoder_forward.1} parent=5 // pred_check_branch
        %220 = sbr.rel (%p217) target = $region40
      $region39: #{spectral_decoder_forward.1} parent=5 // pred_region
        %s221 = ssub.s32 %s12, 1
        // Predicated region
        $region41: #{spectral_decoder_forward.1} parent=39 // pred_check
          %p222 = pneg %p115
        $region42: #{spectral_decoder_forward.1} parent=39 // pred_check_branch
          %224 = sbr.rel (%p222) target = $region44
        $region43: #{spectral_decoder_forward.1} parent=39 // pred_region
          %225 = dma.done [#allocation3], 4096
        $region44: #{spectral_decoder_forward.1} parent=39 // pred_fallthru
          _
        %p226 = scmp.lt.s32.totalorder %s21, 1
        %s227 = scalar_select %p226, %s21, 1
        %p228 = scmp.lt.s32.totalorder %s22, 0
        %s229 = scalar_select %p228, %s22, 0
        %s230 = sadd.s32 %s229, %s227
        %s231 = smul.addr %s230, 8
        %s232 = scalar_lea.vmem %s0, %s231
        %p233 = pneg %p52
        %p234 = pneg %p49
        %p235 = pneg %p73
        %p236 = pneg %p70
        %p237 = pneg %p94
        %p238 = pneg %p91
        %p239 = pneg %p115
        %p240 = pneg %p112
        %p241 = pneg %p136
        %p242 = pneg %p133
        %p243 = pneg %p164
        %p244 = pneg %p161
        %p245 = scmp.lt.s32.totalorder %s21, 1
        %s246 = scalar_select %p245, %s21, 1
        %p247 = scmp.lt.s32.totalorder %s22, 0
        %s248 = scalar_select %p247, %s22, 0
        %s249 = smul.addr %s246, 32
        %s250 = sadd.s32 %s248, %s249
        %s251 = smul.addr %s250, 8
        %s252 = scalar_lea.vmem %s5, %s251
        %p253 = scmp.lt.s32.totalorder %s21, 1
        %s254 = scalar_select %p253, %s21, 1
        %p255 = scmp.lt.s32.totalorder %s22, 0
        %s256 = scalar_select %p255, %s22, 0
        %s257 = sadd.s32 %s256, %s254
        %s258 = smul.addr %s257, 8
        %s259 = scalar_lea.vmem %s0, %s258
        %p260 = scmp.lt.s32.totalorder %s21, 1
        %s261 = scalar_select %p260, %s21, 1
        %p262 = scmp.lt.s32.totalorder %s22, 0
        %s263 = scalar_select %p262, %s22, 0
        %s264 = smul.addr %s261, 32
        %s265 = sadd.s32 %s263, %s264
        %s266 = smul.addr %s265, 8
        %s267 = scalar_lea.vmem %s5, %s266
        %v268 = vld [vmem:[%s259] sm:$0xff]
        %v269 = vld [vmem:[%s1] sm:$0xff]
        %v270 = vld [vmem:[%s1 + $0x8] sm:$0xff]
        %v271 = vld [vmem:[%s1 + $0x10] sm:$0xff]
        %v272 = vld [vmem:[%s1 + $0x18] sm:$0xff]
        %v273 = vld [vmem:[%s2] sm:$0x1]
        %v275 = vlaneseq
        %v276 = vshrl.u32 %v275, 7
        %v277 = vsub.s32 0, %v276
        %v278 = vrot.slane %v273, %v277
        %vm280 = vcmask 261120
        %v282 = vsel %vm280, %v268, 0
        %284 = vmatprep.subr.mxu0 0.0
        %285 = vmatpush1.msra.mxu0 %v269
        %286 = vmatprep.subr.mxu0 0.0
        %287 = vmatpush1.msra.mxu0 %v270
        %288 = vmatprep.subr.mxu0 0.0
        %289 = vmatpush1.msra.mxu0 %v271
        %290 = vmatprep.subr.mxu0 0.0
        %291 = vmatpush1.msra.mxu0 %v272
        %292 = vmatprep.subr.mxu0 0.0
        %293 = vmatpush1.msra.mxu0 0.0
        %294 = vmatprep.subr.mxu0 0.0
        %295 = vmatpush1.msra.mxu0 0.0
        %296 = vmatprep.subr.mxu0 0.0
        %297 = vmatpush1.msra.mxu0 0.0
        %298 = vmatprep.subr.mxu0 0.0
        %299 = vmatpush1.msra.mxu0 0.0
        %300 = vmatprep.subr.mxu0 0.0
        %301 = vmatpush1.msra.mxu0 0.0
        %302 = vmatprep.subr.mxu0 0.0
        %303 = vmatpush1.msra.mxu0 0.0
        %304 = vmatprep.subr.mxu0 0.0
        %305 = vmatpush1.msra.mxu0 0.0
        %306 = vmatprep.subr.mxu0 0.0
        %307 = vmatpush1.msra.mxu0 0.0
        %308 = vmatprep.subr.mxu0 0.0
        %309 = vmatpush1.msra.mxu0 0.0
        %310 = vmatprep.subr.mxu0 0.0
        %311 = vmatpush1.msra.mxu0 0.0
        %312 = vmatprep.subr.mxu0 0.0
        %313 = vmatpush1.msra.mxu0 0.0
        %314 = vmatprep.subr.mxu0 0.0
        %315 = vmatpush1.msra.mxu0 0.0
        %316 = vmatprep.subr.mxu0 0.0
        %317 = vmatpush1.msra.mxu0 0.0
        %318 = vmatprep.subr.mxu0 0.0
        %319 = vmatpush1.msra.mxu0 0.0
        %320 = vmatprep.subr.mxu0 0.0
        %321 = vmatpush1.msra.mxu0 0.0
        %322 = vmatprep.subr.mxu0 0.0
        %323 = vmatpush1.msra.mxu0 0.0
        %324 = vmatprep.subr.mxu0 0.0
        %325 = vmatpush1.msra.mxu0 0.0
        %326 = vmatprep.subr.mxu0 0.0
        %327 = vmatpush1.msra.mxu0 0.0
        %328 = vmatprep.subr.mxu0 0.0
        %329 = vmatpush1.msra.mxu0 0.0
        %330 = vmatprep.subr.mxu0 0.0
        %331 = vmatpush1.msra.mxu0 0.0
        %332 = vmatprep.subr.mxu0 0.0
        %333 = vmatpush1.msra.mxu0 0.0
        %334 = vmatprep.subr.mxu0 0.0
        %335 = vmatpush1.msra.mxu0 0.0
        %336 = vmatprep.subr.mxu0 0.0
        %337 = vmatpush1.msra.mxu0 0.0
        %338 = vmatprep.subr.mxu0 0.0
        %339 = vmatpush1.msra.mxu0 0.0
        %340 = vmatprep.subr.mxu0 0.0
        %341 = vmatpush1.msra.mxu0 0.0
        %342 = vmatprep.subr.mxu0 0.0
        %343 = vmatpush1.msra.mxu0 0.0
        %344 = vmatprep.subr.mxu0 0.0
        %345 = vmatpush1.msra.mxu0 0.0
        %346 = vmatprep.subr.mxu0 0.0
        %347 = vmatpush1.msra.mxu0 0.0
        %348 = vmatprep.mubr.f32.mxu0 0.0
        %349 = vmatmul.mubr.f32.gmra.mrb[0].mxu0 %v282
        %v350 = vpop.f32.mrb[0].mxu0
        %v351 = vadd.f32 %v278, %v350
        %v352 = vpop.f32.mrb[0].mxu0
        %353 = vdwg.mxu0
        %v354 = vmul.f32 %v351, 0.2
        %v355 = vmax.f32 %v351, %v354
        %v356 = vld [vmem:[#allocation2] sm:$0xff]
        %v357 = vld [vmem:[#allocation2 + $0x8] sm:$0xff]
        %v358 = vld [vmem:[#allocation2 + $0x10] sm:$0xff]
        %v359 = vld [vmem:[#allocation2 + $0x18] sm:$0xff]
        %v360 = vld [vmem:[#allocation2 + $0x20] sm:$0xff]
        %v361 = vld [vmem:[#allocation2 + $0x28] sm:$0xff]
        %v362 = vld [vmem:[#allocation2 + $0x30] sm:$0xff]
        %v363 = vld [vmem:[#allocation2 + $0x38] sm:$0xff]
        %v364 = vld [vmem:[#allocation2 + $0x40] sm:$0xff]
        %v365 = vld [vmem:[#allocation2 + $0x48] sm:$0xff]
        %v366 = vld [vmem:[#allocation2 + $0x50] sm:$0xff]
        %v367 = vld [vmem:[#allocation2 + $0x58] sm:$0xff]
        %v368 = vld [vmem:[#allocation2 + $0x60] sm:$0xff]
        %v369 = vld [vmem:[#allocation2 + $0x68] sm:$0xff]
        %v370 = vld [vmem:[#allocation2 + $0x70] sm:$0xff]
        %v371 = vld [vmem:[#allocation2 + $0x78] sm:$0xff]
        %v372 = vld [vmem:[#allocation2 + $0x80] sm:$0xff]
        %v373 = vld [vmem:[#allocation2 + $0x88] sm:$0xff]
        %v374 = vld [vmem:[#allocation2 + $0x90] sm:$0xff]
        %v375 = vld [vmem:[#allocation2 + $0x98] sm:$0xff]
        %v376 = vld [vmem:[#allocation2 + $0xa0] sm:$0xff]
        %v377 = vld [vmem:[#allocation2 + $0xa8] sm:$0xff]
        %v378 = vld [vmem:[#allocation2 + $0xb0] sm:$0xff]
        %v379 = vld [vmem:[#allocation2 + $0xb8] sm:$0xff]
        %v380 = vld [vmem:[#allocation2 + $0xc0] sm:$0xff]
        %v381 = vld [vmem:[#allocation2 + $0xc8] sm:$0xff]
        %v382 = vld [vmem:[#allocation2 + $0xd0] sm:$0xff]
        %v383 = vld [vmem:[#allocation2 + $0xd8] sm:$0xff]
        %v384 = vld [vmem:[#allocation2 + $0xe0] sm:$0xff]
        %v385 = vld [vmem:[#allocation2 + $0xe8] sm:$0xff]
        %v386 = vld [vmem:[#allocation2 + $0xf0] sm:$0xff]
        %v387 = vld [vmem:[#allocation2 + $0xf8] sm:$0xff]
        %v388 = vld [vmem:[%s4] sm:$0x3]
        %v390 = vlaneseq
        %v391 = vshrl.u32 %v390, 7
        %v392 = vsub.s32 0, %v391
        %v393 = vrot.slane %v388, %v392
        %v394 = vlaneseq
        %v395 = vshrl.u32 %v394, 7
        %v396 = vsub.s32 1, %v395
        %v397 = vrot.slane %v388, %v396
        %400 = vmatprep.subr.mxu0 %v357
        %401 = vmatpush1.msra.mxu0 %v356
        %402 = vmatprep.subr.mxu0 %v359
        %403 = vmatpush1.msra.mxu0 %v358
        %404 = vmatprep.subr.mxu0 %v361
        %405 = vmatpush1.msra.mxu0 %v360
        %406 = vmatprep.subr.mxu0 %v363
        %407 = vmatpush1.msra.mxu0 %v362
        %408 = vmatprep.subr.mxu0 %v365
        %409 = vmatpush1.msra.mxu0 %v364
        %410 = vmatprep.subr.mxu0 %v367
        %411 = vmatpush1.msra.mxu0 %v366
        %412 = vmatprep.subr.mxu0 %v369
        %413 = vmatpush1.msra.mxu0 %v368
        %414 = vmatprep.subr.mxu0 %v371
        %415 = vmatpush1.msra.mxu0 %v370
        %416 = vmatprep.subr.mxu0 %v373
        %417 = vmatpush1.msra.mxu0 %v372
        %418 = vmatprep.subr.mxu0 %v375
        %419 = vmatpush1.msra.mxu0 %v374
        %420 = vmatprep.subr.mxu0 %v377
        %421 = vmatpush1.msra.mxu0 %v376
        %422 = vmatprep.subr.mxu0 %v379
        %423 = vmatpush1.msra.mxu0 %v378
        %424 = vmatprep.subr.mxu0 %v381
        %425 = vmatpush1.msra.mxu0 %v380
        %426 = vmatprep.subr.mxu0 %v383
        %427 = vmatpush1.msra.mxu0 %v382
        %428 = vmatprep.subr.mxu0 %v385
        %429 = vmatpush1.msra.mxu0 %v384
        %430 = vmatprep.subr.mxu0 %v387
        %431 = vmatpush1.msra.mxu0 %v386
        %432 = vmatprep.subr.mxu0 0.0
        %433 = vmatpush1.msra.mxu0 0.0
        %434 = vmatprep.subr.mxu0 0.0
        %435 = vmatpush1.msra.mxu0 0.0
        %436 = vmatprep.subr.mxu0 0.0
        %437 = vmatpush1.msra.mxu0 0.0
        %438 = vmatprep.subr.mxu0 0.0
        %439 = vmatpush1.msra.mxu0 0.0
        %440 = vmatprep.subr.mxu0 0.0
        %441 = vmatpush1.msra.mxu0 0.0
        %442 = vmatprep.subr.mxu0 0.0
        %443 = vmatpush1.msra.mxu0 0.0
        %444 = vmatprep.subr.mxu0 0.0
        %445 = vmatpush1.msra.mxu0 0.0
        %446 = vmatprep.subr.mxu0 0.0
        %447 = vmatpush1.msra.mxu0 0.0
        %448 = vmatprep.subr.mxu0 0.0
        %449 = vmatpush1.msra.mxu0 0.0
        %450 = vmatprep.subr.mxu0 0.0
        %451 = vmatpush1.msra.mxu0 0.0
        %452 = vmatprep.subr.mxu0 0.0
        %453 = vmatpush1.msra.mxu0 0.0
        %454 = vmatprep.subr.mxu0 0.0
        %455 = vmatpush1.msra.mxu0 0.0
        %456 = vmatprep.subr.mxu0 0.0
        %457 = vmatpush1.msra.mxu0 0.0
        %458 = vmatprep.subr.mxu0 0.0
        %459 = vmatpush1.msra.mxu0 0.0
        %460 = vmatprep.subr.mxu0 0.0
        %461 = vmatpush1.msra.mxu0 0.0
        %462 = vmatprep.subr.mxu0 0.0
        %463 = vmatpush1.msra.mxu0 0.0
        %464 = vmatprep.mubr.f32.mxu0 0.0
        %465 = vmatmul.mubr.f32.gmra.mrb[0].mxu0 %v355
        %v466 = vpop.f32.mrb[0].mxu0
        %v467 = vadd.f32 %v393, %v466
        %v468 = vpop.f32.mrb[0].mxu0
        %v469 = vadd.f32 %v397, %v468
        %470 = vdwg.mxu0
        %v471 = vand.u32 2147483647, %v467
        %v472 = vand.u32 2147483647, %v469
        %v473 = vsub.f32 0.0, %v471
        %v474 = vsub.f32 0.0, %v472
        %v475 = vmul.f32 %v473, 1.442695
        %v476 = vpow.pop %v475
        %v477 = vmul.f32 %v474, 1.442695
        %v478 = vpow.pop %v477
        %v479 = vmin.f32 %v467, 0.0
        %v480 = vmin.f32 %v469, 0.0
        %v481 = vmul.f32 %v479, 2.3025851
        %v482 = vmul.f32 %v480, 2.3025851
        %v483 = vmul.f32 %v481, 1.442695
        %v484 = vpow.pop %v483
        %v485 = vmul.f32 %v482, 1.442695
        %v486 = vpow.pop %v485
        %v487 = vmul.f32 %v476, 2.0
        %v488 = vmul.f32 %v478, 2.0
        %v489 = vsub.f32 %v487, 1.0
        %v490 = vsub.f32 %v488, 1.0
        %v491 = vmul.f32 %v489, -1.1188434e-05
        %v492 = vmul.f32 %v490, -1.1188434e-05
        %v493 = vadd.f32 %v491, 2.965075e-05
        %v494 = vadd.f32 %v492, 2.965075e-05
        %v495 = vmul.f32 %v493, %v489
        %v496 = vmul.f32 %v494, %v490
        %v497 = vadd.f32 %v495, -4.162766e-05
        %v498 = vadd.f32 %v496, -4.162766e-05
        %v499 = vmul.f32 %v497, %v489
        %v500 = vmul.f32 %v498, %v490
        %v501 = vadd.f32 %v499, 0.000114402654
        %v502 = vadd.f32 %v500, 0.000114402654
        %v503 = vmul.f32 %v501, %v489
        %v504 = vmul.f32 %v502, %v490
        %v505 = vadd.f32 %v503, -0.00035573298
        %v506 = vadd.f32 %v504, -0.00035573298
        %v507 = vmul.f32 %v505, %v489
        %v508 = vmul.f32 %v506, %v490
        %v509 = vadd.f32 %v507, 0.0009289208
        %v510 = vadd.f32 %v508, 0.0009289208
        %v511 = vmul.f32 %v509, %v489
        %v512 = vmul.f32 %v510, %v490
        %v513 = vadd.f32 %v511, -0.0023620327
        %v514 = vadd.f32 %v512, -0.0023620327
        %v515 = vmul.f32 %v513, %v489
        %v516 = vmul.f32 %v514, %v490
        %v517 = vadd.f32 %v515, 0.0059763063
        %v518 = vadd.f32 %v516, 0.0059763063
        %v519 = vmul.f32 %v517, %v489
        %v520 = vmul.f32 %v518, %v490
        %v521 = vadd.f32 %v519, -0.014742424
        %v522 = vadd.f32 %v520, -0.014742424
        %v523 = vmul.f32 %v521, %v489
        %v524 = vmul.f32 %v522, %v490
        %v525 = vadd.f32 %v523, 0.03508608
        %v526 = vadd.f32 %v524, 0.03508608
        %v527 = vmul.f32 %v525, %v489
        %v528 = vmul.f32 %v526, %v490
        %v529 = vadd.f32 %v527, -0.07939968
        %v530 = vadd.f32 %v528, -0.07939968
        %v531 = vmul.f32 %v529, %v489
        %v532 = vmul.f32 %v530, %v490
        %v533 = vadd.f32 %v531, 0.1660856
        %v534 = vadd.f32 %v532, 0.1660856
        %v535 = vmul.f32 %v533, %v489
        %v536 = vmul.f32 %v534, %v490
        %v537 = vadd.f32 %v535, -0.30173752
        %v538 = vadd.f32 %v536, -0.30173752
        %v539 = vmul.f32 %v537, %v489
        %v540 = vmul.f32 %v538, %v490
        %v541 = vadd.f32 %v539, 0.39312884
        %v542 = vadd.f32 %v540, 0.39312884
        %v543 = vmul.f32 %v484, 2.0
        %v544 = vmul.f32 %v486, 2.0
        %v545 = vmul.f32 %v543, %v541
        %v546 = vmul.f32 %v544, %v542
        %v547 = vadd.f32 %v545, 1e-07
        %v548 = vadd.f32 %v546, 1e-07
        %549 = vxpose.xlu0.b32.start [1/16] %v547, 128
        %550 = vxpose.xlu0.b32.cont [2/16] 0.0, 128
        %551 = vxpose.xlu0.b32.cont [3/16] 0.0, 128
        %552 = vxpose.xlu0.b32.cont [4/16] 0.0, 128
        %553 = vxpose.xlu0.b32.cont [5/16] 0.0, 128
        %554 = vxpose.xlu0.b32.cont [6/16] 0.0, 128
        %555 = vxpose.xlu0.b32.cont [7/16] 0.0, 128
        %556 = vxpose.xlu0.b32.cont [8/16] 0.0, 128
        %557 = vxpose.xlu0.b32.cont [9/16] 0.0, 128
        %558 = vxpose.xlu0.b32.cont [10/16] 0.0, 128
        %559 = vxpose.xlu0.b32.cont [11/16] 0.0, 128
        %560 = vxpose.xlu0.b32.cont [12/16] 0.0, 128
        %561 = vxpose.xlu0.b32.cont [13/16] 0.0, 128
        %562 = vxpose.xlu0.b32.cont [14/16] 0.0, 128
        %563 = vxpose.xlu0.b32.cont [15/16] 0.0, 128
        %564 = vxpose.xlu0.b32.end [16/16] 0.0, 128
        %v565 = vpop.trf.xlu0
        %v566 = vpop.trf.xlu0
        %v567 = vpop.trf.xlu0
        %v568 = vpop.trf.xlu0
        %v569 = vpop.trf.xlu0
        %v570 = vpop.trf.xlu0
        %v571 = vpop.trf.xlu0
        %v572 = vpop.trf.xlu0
        %v573 = vpop.trf.xlu0
        %v574 = vpop.trf.xlu0
        %v575 = vpop.trf.xlu0
        %v576 = vpop.trf.xlu0
        %v577 = vpop.trf.xlu0
        %v578 = vpop.trf.xlu0
        %v579 = vpop.trf.xlu0
        %v580 = vpop.trf.xlu0
        %581 = vxpose.xlu0.b32.start [1/16] %v548, 128
        %582 = vxpose.xlu0.b32.cont [2/16] 0.0, 128
        %583 = vxpose.xlu0.b32.cont [3/16] 0.0, 128
        %584 = vxpose.xlu0.b32.cont [4/16] 0.0, 128
        %585 = vxpose.xlu0.b32.cont [5/16] 0.0, 128
        %586 = vxpose.xlu0.b32.cont [6/16] 0.0, 128
        %587 = vxpose.xlu0.b32.cont [7/16] 0.0, 128
        %588 = vxpose.xlu0.b32.cont [8/16] 0.0, 128
        %589 = vxpose.xlu0.b32.cont [9/16] 0.0, 128
        %590 = vxpose.xlu0.b32.cont [10/16] 0.0, 128
        %591 = vxpose.xlu0.b32.cont [11/16] 0.0, 128
        %592 = vxpose.xlu0.b32.cont [12/16] 0.0, 128
        %593 = vxpose.xlu0.b32.cont [13/16] 0.0, 128
        %594 = vxpose.xlu0.b32.cont [14/16] 0.0, 128
        %595 = vxpose.xlu0.b32.cont [15/16] 0.0, 128
        %596 = vxpose.xlu0.b32.end [16/16] 0.0, 128
        %v597 = vpop.trf.xlu0
        %v598 = vpop.trf.xlu0
        %v599 = vpop.trf.xlu0
        %v600 = vpop.trf.xlu0
        %v601 = vpop.trf.xlu0
        %v602 = vpop.trf.xlu0
        %v603 = vpop.trf.xlu0
        %v604 = vpop.trf.xlu0
        %v605 = vpop.trf.xlu0
        %v606 = vpop.trf.xlu0
        %v607 = vpop.trf.xlu0
        %v608 = vpop.trf.xlu0
        %v609 = vpop.trf.xlu0
        %v610 = vpop.trf.xlu0
        %v611 = vpop.trf.xlu0
        %v612 = vpop.trf.xlu0
        %vm613 = vcmask 64512
        %614 = vst.msk [vmem:[%s267] sm:$0xff] %vm613, %v565
        %615 = vst.msk [vmem:[%s267 + $0x8] sm:$0xff] %vm613, %v566
        %616 = vst.msk [vmem:[%s267 + $0x10] sm:$0xff] %vm613, %v567
        %617 = vst.msk [vmem:[%s267 + $0x18] sm:$0xff] %vm613, %v568
        %618 = vst.msk [vmem:[%s267 + $0x20] sm:$0xff] %vm613, %v569
        %619 = vst.msk [vmem:[%s267 + $0x28] sm:$0xff] %vm613, %v570
        %620 = vst.msk [vmem:[%s267 + $0x30] sm:$0xff] %vm613, %v571
        %621 = vst.msk [vmem:[%s267 + $0x38] sm:$0xff] %vm613, %v572
        %622 = vst.msk [vmem:[%s267 + $0x40] sm:$0xff] %vm613, %v573
        %623 = vst.msk [vmem:[%s267 + $0x48] sm:$0xff] %vm613, %v574
        %624 = vst.msk [vmem:[%s267 + $0x50] sm:$0xff] %vm613, %v575
        %625 = vst.msk [vmem:[%s267 + $0x58] sm:$0xff] %vm613, %v576
        %626 = vst.msk [vmem:[%s267 + $0x60] sm:$0xff] %vm613, %v577
        %627 = vst.msk [vmem:[%s267 + $0x68] sm:$0xff] %vm613, %v578
        %628 = vst.msk [vmem:[%s267 + $0x70] sm:$0xff] %vm613, %v579
        %629 = vst.msk [vmem:[%s267 + $0x78] sm:$0xff] %vm613, %v580
        %630 = vst.msk [vmem:[%s267 + $0x80] sm:$0xff] %vm613, %v597
        %631 = vst.msk [vmem:[%s267 + $0x88] sm:$0xff] %vm613, %v598
        %632 = vst.msk [vmem:[%s267 + $0x90] sm:$0xff] %vm613, %v599
        %633 = vst.msk [vmem:[%s267 + $0x98] sm:$0xff] %vm613, %v600
        %634 = vst.msk [vmem:[%s267 + $0xa0] sm:$0xff] %vm613, %v601
        %635 = vst.msk [vmem:[%s267 + $0xa8] sm:$0xff] %vm613, %v602
        %636 = vst.msk [vmem:[%s267 + $0xb0] sm:$0xff] %vm613, %v603
        %637 = vst.msk [vmem:[%s267 + $0xb8] sm:$0xff] %vm613, %v604
        %638 = vst.msk [vmem:[%s267 + $0xc0] sm:$0xff] %vm613, %v605
        %639 = vst.msk [vmem:[%s267 + $0xc8] sm:$0xff] %vm613, %v606
        %640 = vst.msk [vmem:[%s267 + $0xd0] sm:$0xff] %vm613, %v607
        %641 = vst.msk [vmem:[%s267 + $0xd8] sm:$0xff] %vm613, %v608
        %642 = vst.msk [vmem:[%s267 + $0xe0] sm:$0xff] %vm613, %v609
        %643 = vst.msk [vmem:[%s267 + $0xe8] sm:$0xff] %vm613, %v610
        %644 = vst.msk [vmem:[%s267 + $0xf0] sm:$0xff] %vm613, %v611
        %645 = vst.msk [vmem:[%s267 + $0xf8] sm:$0xff] %vm613, %v612
        %p646 = scmp.lt.s32.totalorder %s21, 1
        %s647 = scalar_select %p646, %s21, 1
        %p648 = scmp.lt.s32.totalorder %s22, 0
        %s649 = scalar_select %p648, %s22, 0
        %s650 = smul.addr %s647, 32
        %s651 = sadd.s32 %s649, %s650
        %s652 = smul.addr %s651, 8
        %s653 = scalar_lea.vmem %s5, %s652
        // Predicated region
        $region45: #{spectral_decoder_forward.1} parent=39 // pred_check
          %p654 = pneg %p161
        $region46: #{spectral_decoder_forward.1} parent=39 // pred_check_branch
          %656 = sbr.rel (%p654) target = $region48
        $region47: #{spectral_decoder_forward.1} parent=39 // pred_region
          _
        $region48: #{spectral_decoder_forward.1} parent=39 // pred_fallthru
          _
      $region40: #{spectral_decoder_forward.1} parent=5 // pred_fallthru
        _
      %p657 = scmp.le.s32.totalorder 2, %s12
      // Predicated region
      $region49: #{spectral_decoder_forward.1} parent=5 // pred_check
        %p658 = pneg %p657
      $region50: #{spectral_decoder_forward.1} parent=5 // pred_check_branch
        %660 = sbr.rel (%p658) target = $region52
      $region51: #{spectral_decoder_forward.1} parent=5 // pred_region
        %s661 = ssub.s32 %s12, 2
        // Predicated region
        $region53: #{spectral_decoder_forward.1} parent=51 // pred_check
          %p662 = pneg %p167
        $region54: #{spectral_decoder_forward.1} parent=51 // pred_check_branch
          %664 = sbr.rel (%p662) target = $region56
        $region55: #{spectral_decoder_forward.1} parent=51 // pred_region
          %p665 = scmp.lt.s32.totalorder %s23, 1
          %s666 = scalar_select %p665, %s23, 1
          %p667 = scmp.lt.s32.totalorder %s24, 0
          %s668 = scalar_select %p667, %s24, 0
          %s669 = smul.addr %s666, 32
          %s670 = sadd.s32 %s668, %s669
          %s671 = smul.addr %s670, 8
          %s672 = scalar_lea.vmem %s5, %s671
        $region56: #{spectral_decoder_forward.1} parent=51 // pred_fallthru
          _
      $region52: #{spectral_decoder_forward.1} parent=5 // pred_fallthru
        _
    $region6: #{spectral_decoder_forward.1} parent=1 // loop_footer
      %s16 = sadd.s32 1, %s12
    $region7: #{spectral_decoder_forward.1} parent=1 // loop_footer_branch
      %11 = sbr.rel target = $region3
    $region8: #{spectral_decoder_forward.1} parent=1 // loop_exit
      _
    %673 = vsyncpa [#allocation3], 1
    %s674 = scalar_lea.sflag [#allocation3], 1
    %675 = vsyncpa %s674, 1

</llo_original>
